<compile_context>
chip_gen: v5e
topology: v5e:2x2
jax: 0.10.0
libtpu: 0.0.40
codegen_flags: <defaults>
</compile_context>

<pallas_src>
import functools

import jax
import jax.numpy as jnp
from jax.experimental import pallas as pl
from jax.experimental.pallas import tpu as pltpu


def _round_up(x: int, m: int) -> int:
    return ((x + m - 1) // m) * m


def _sublane_multiple(dtype) -> int:
    # Packed-sublane alignment: f32 -> 8, bf16 -> 16, int8/fp8 -> 32.
    return max(8, 32 // jnp.dtype(dtype).itemsize)


def _vmem_cap_bytes() -> int:
    """Generation-aware scoped-VMEM cap, leaving headroom for compiler scratch."""
    try:
        phys = int(pltpu.get_tpu_info().vmem_capacity_bytes)
    except Exception:
        phys = 64 << 20  # conservative fallback (v7x per-TC VMEM)
    # Leave ~12 MiB for Mosaic-internal scratch / semaphores / DMA buffers.
    return max(phys - (12 << 20), 32 << 20)


def _abc_layer_kernel(x_ref, a_ref, b_ref, o_ref, acc_ref, *, scale):
    # x_ref: (tm, tk), a_ref: (tk, tn), b_ref: (1, tn) [bias already * bias_tune]
    # o_ref: (tm, tn), acc_ref: (tm, tn) f32 scratch (persists across K steps)
    k = pl.program_id(2)

    partial = jnp.dot(x_ref[...], a_ref[...], preferred_element_type=jnp.float32)

    @pl.when(k == 0)
    def _():
        acc_ref[...] = partial  # first K-step: write directly, no zero-init pass

    @pl.when(k != 0)
    def _():
        acc_ref[...] += partial

    @pl.when(k == pl.num_programs(2) - 1)
    def _():
        acc = acc_ref[...]
        if scale != 1.0:  # compile-time constant; skipped when scale folded into A
            acc = acc * scale
        o_ref[...] = (acc + b_ref[...]).astype(o_ref.dtype)


def _abc_layer_forward_impl(
    x,
    A,
    bias,
    bias_tune,
    *,
    a_exp,
    tm=None,
    tn=None,
    tk=None,
    compute_dtype=jnp.bfloat16,
    out_dtype=None,
):
    """Pallas TPU implementation of abc_Layer.forward.

    x:    [M, K]  float32 (or bf16)
    A:    [K, N]  float32 (or bf16)
    bias: [N]     float32
    bias_tune: scalar (non-trainable tuning factor)
    a_exp: the 'a' exponent of the abc parametrization (input_width ** (-a))
    compute_dtype: matmul operand dtype. bf16 (default) is the production path
                   on all TPU generations; pass jnp.float32 for closest parity
                   with the PyTorch module. Accumulation is always f32.
    out_dtype: output dtype (defaults to x.dtype; pass bf16 to halve write bytes).
    """
    M, K = x.shape
    K2, N = A.shape
    assert K == K2, "x/A inner dims must match"
    out_dtype = x.dtype if out_dtype is None else out_dtype
    scale = float(K) ** (-float(a_exp))

    in_itemsize = jnp.dtype(compute_dtype).itemsize
    out_itemsize = jnp.dtype(out_dtype).itemsize
    sub = _sublane_multiple(compute_dtype)

    # Defaults tuned for the bf16 MXU path; still a small fraction of VMEM.
    tm = 512 if tm is None else tm
    tn = 512 if tn is None else tn
    tk = (1024 if in_itemsize <= 2 else 512) if tk is None else tk

    # Effective tile sizes: hardware aligned, never larger than the padded dims.
    tm_e = min(_round_up(tm, sub), _round_up(M, sub))
    tn_e = min(_round_up(tn, 128), _round_up(N, 128))
    tk_e = min(_round_up(tk, 128), _round_up(K, 128))

    Mp = _round_up(M, tm_e)
    Np = _round_up(N, tn_e)
    Kp = _round_up(K, tk_e)

    # v7x megacore: make sure the parallel (i, j) grid has >= 2 tiles when
    # possible so both TensorCores get work (negligible cost on v5e/v6e).
    if (Mp // tm_e) * (Np // tn_e) == 1:
        if tn_e >= 256:
            tn_e = _round_up(tn_e // 2, 128)
            Np = _round_up(N, tn_e)
        elif tm_e >= 2 * sub:
            tm_e = _round_up(tm_e // 2, sub)
            Mp = _round_up(M, tm_e)

    # Fold K**(-a) into A during the (already required) cast on the bf16 path;
    # keep the epilogue scale for the f32 parity path.
    fold_scale = jnp.dtype(compute_dtype) != jnp.dtype(jnp.float32)
    kernel_scale = 1.0 if fold_scale else scale

    xp = x if x.dtype == jnp.dtype(compute_dtype) else x.astype(compute_dtype)
    if fold_scale:
        Ap = (A * jnp.asarray(scale, A.dtype)).astype(compute_dtype)
    else:
        Ap = A if A.dtype == jnp.dtype(compute_dtype) else A.astype(compute_dtype)

    # Fold bias_tune into the bias once (single fused pass under jit).
    bias_eff = (
        bias.astype(jnp.float32) * jnp.asarray(bias_tune, jnp.float32)
    ).reshape(1, N)

    # Zero-pad only when shapes are not tile-aligned.
    if (Mp, Kp) != (M, K):
        xp = jnp.pad(xp, ((0, Mp - M), (0, Kp - K)))
    if (Kp, Np) != (K, N):
        Ap = jnp.pad(Ap, ((0, Kp - K), (0, Np - N)))
    if Np != N:
        bias_eff = jnp.pad(bias_eff, ((0, 0), (0, Np - N)))

    grid = (Mp // tm_e, Np // tn_e, Kp // tk_e)

    # VMEM budget: double-buffered inputs/outputs + f32 accumulator, with
    # headroom, capped generation-aware (v5e/v6e ~116 MiB, v7x ~52 MiB).
    vmem_need = (
        2
        * (
            tm_e * tk_e * in_itemsize
            + tk_e * tn_e * in_itemsize
            + tn_e * 4
            + tm_e * tn_e * out_itemsize
        )
        + tm_e * tn_e * 4
    )
    vmem_limit = min(max(vmem_need + (8 << 20), 32 << 20), _vmem_cap_bytes())

    kernel = functools.partial(_abc_layer_kernel, scale=kernel_scale)

    out_padded = pl.pallas_call(
        kernel,
        out_shape=jax.ShapeDtypeStruct((Mp, Np), out_dtype),
        grid_spec=pltpu.PrefetchScalarGridSpec(
            num_scalar_prefetch=0,
            grid=grid,
            in_specs=[
                # x tiled over (M, K)
                pl.BlockSpec((tm_e, tk_e), lambda i, j, k: (i, k)),
                # A tiled over (K, N)
                pl.BlockSpec((tk_e, tn_e), lambda i, j, k: (k, j)),
                # bias row tiled over N only
                pl.BlockSpec((1, tn_e), lambda i, j, k: (0, j)),
            ],
            out_specs=pl.BlockSpec((tm_e, tn_e), lambda i, j, k: (i, j)),
            scratch_shapes=[pltpu.VMEM((tm_e, tn_e), jnp.float32)],
        ),
        compiler_params=pltpu.CompilerParams(
            dimension_semantics=("parallel", "parallel", "arbitrary"),
            vmem_limit_bytes=vmem_limit,
        ),
    )(xp, Ap, bias_eff)

    if (Mp, Np) != (M, N):
        out_padded = out_padded[:M, :N]
    return out_padded


# Jit the whole wrapper so the scale-fold / cast / pad prep fuses into a single
# pass instead of extra eager HBM round-trips before the kernel.
abc_layer_forward = jax.jit(
    _abc_layer_forward_impl,
    static_argnames=("a_exp", "tm", "tn", "tk", "compute_dtype", "out_dtype"),
)


if __name__ == "__main__":
    # Module hyper-parameters (mirrors abc_Layer(input_width, output_width, a, b))
    input_width = 32
    output_width = 32
    a_param = 0.5
    b_param = 0.5
    bias_bool = True
    bias_tune = 1.0

    key = jax.random.PRNGKey(0)
    k_x, k_A, k_b, k_x2, k_A2, k_b2 = jax.random.split(key, 6)

    # --- Case 1: demo shapes, default bf16 production path ------------------
    A = jax.random.normal(k_A, (input_width, output_width), dtype=jnp.float32) * (
        float(input_width) ** (-b_param)
    )
    bias = (
        jax.random.normal(k_b, (output_width,), dtype=jnp.float32)
        if bias_bool
        else jnp.zeros((output_width,), dtype=jnp.float32)
    )
    M = 16
    x = jax.random.normal(k_x, (M, input_width), dtype=jnp.float32)

    y = abc_layer_forward(x, A, bias, bias_tune, a_exp=a_param)  # bf16 compute
    y = jax.block_until_ready(y)
    y_ref = x @ A * (float(input_width) ** (-a_param)) + bias * bias_tune
    assert y.shape == (M, output_width)
    assert jnp.allclose(y, y_ref, atol=3e-2, rtol=3e-2), "bf16 mismatch vs reference"

    # --- Case 2: non-tile-aligned shapes + f32 parity path -------------------
    K2, N2, M2 = 100, 70, 37
    A2 = jax.random.normal(k_A2, (K2, N2), dtype=jnp.float32) * (float(K2) ** (-b_param))
    bias2 = jax.random.normal(k_b2, (N2,), dtype=jnp.float32)
    x2 = jax.random.normal(k_x2, (M2, K2), dtype=jnp.float32)

    y2 = abc_layer_forward(
        x2, A2, bias2, bias_tune, a_exp=a_param, compute_dtype=jnp.float32
    )
    y2 = jax.block_until_ready(y2)
    y2_ref = x2 @ A2 * (float(K2) ** (-a_param)) + bias2 * bias_tune
    assert y2.shape == (M2, N2)
    assert jnp.allclose(y2, y2_ref, atol=1e-5, rtol=1e-5), "f32 mismatch vs reference"

    print("KERNEL_OK")
</pallas_src>

<mosaic_0001>
module attributes {stable_mosaic.version = 11 : i64} {
  func.func @_abc_layer_kernel(%arg0: i32, %arg1: i32, %arg2: i32, %arg3: memref<16x128xbf16, #tpu.memory_space<vmem>>, %arg4: memref<128x128xbf16, #tpu.memory_space<vmem>>, %arg5: memref<1x128xf32, #tpu.memory_space<vmem>>, %arg6: memref<16x128xf32, #tpu.memory_space<vmem>>, %arg7: memref<16x128xf32, #tpu.memory_space<vmem>>) attributes {dimension_semantics = [#tpu.dimension_semantics<parallel>, #tpu.dimension_semantics<parallel>, #tpu.dimension_semantics<arbitrary>], iteration_bounds = array<i64: 1, 1, 1>, scalar_prefetch = 0 : i64, scratch_operands = 1 : i64, tpu.core_type = #tpu.core_type<tc>, window_params = [{transform_indices = @transform_0, window_bounds = array<i64: 16, 128>}, {transform_indices = @transform_1, window_bounds = array<i64: 128, 128>}, {transform_indices = @transform_2, window_bounds = array<i64: 1, 128>}, {transform_indices = @transform_3, window_bounds = array<i64: 16, 128>}]} {
    %c0 = arith.constant 0 : index
    %c0_0 = arith.constant 0 : index
    %0 = vector.load %arg3[%c0, %c0_0] : memref<16x128xbf16, #tpu.memory_space<vmem>>, vector<16x128xbf16>
    %c0_1 = arith.constant 0 : index
    %c0_2 = arith.constant 0 : index
    %1 = vector.load %arg4[%c0_1, %c0_2] : memref<128x128xbf16, #tpu.memory_space<vmem>>, vector<128x128xbf16>
    %cst = arith.constant dense<0.000000e+00> : vector<16x128xf32>
    %2 = tpu.matmul %0, %1, %cst {dimension_numbers = #tpu.dot_dimension_numbers<[1], [0], [0], [1], [0, 0, 1, 1], [], []>} : vector<16x128xbf16>, vector<128x128xbf16>, vector<16x128xf32> -> vector<16x128xf32>
    %c0_i32 = arith.constant 0 : i32
    %3 = arith.cmpi eq, %arg2, %c0_i32 : i32
    %4 = arith.extui %3 : i1 to i32
    %c0_i32_3 = arith.constant 0 : i32
    %5 = arith.cmpi ne, %4, %c0_i32_3 : i32
    scf.if %5 {
      %c0_8 = arith.constant 0 : index
      %c0_9 = arith.constant 0 : index
      %12 = vector.load %arg7[%c0_8, %c0_9] : memref<16x128xf32, #tpu.memory_space<vmem>>, vector<16x128xf32>
      tpu.vector_store %arg7[%c0_8, %c0_9], %2 {strides = array<i32>} : memref<16x128xf32, #tpu.memory_space<vmem>>, vector<16x128xf32>,
    } else {
    }
    %c0_i32_4 = arith.constant 0 : i32
    %6 = arith.cmpi ne, %arg2, %c0_i32_4 : i32
    %7 = arith.extui %6 : i1 to i32
    %c0_i32_5 = arith.constant 0 : i32
    %8 = arith.cmpi ne, %7, %c0_i32_5 : i32
    scf.if %8 {
      %c0_8 = arith.constant 0 : index
      %c0_9 = arith.constant 0 : index
      %12 = vector.load %arg7[%c0_8, %c0_9] : memref<16x128xf32, #tpu.memory_space<vmem>>, vector<16x128xf32>
      %13 = arith.addf %12, %2 : vector<16x128xf32>
      %c0_10 = arith.constant 0 : index
      %c0_11 = arith.constant 0 : index
      %14 = vector.load %arg7[%c0_10, %c0_11] : memref<16x128xf32, #tpu.memory_space<vmem>>, vector<16x128xf32>
      tpu.vector_store %arg7[%c0_10, %c0_11], %13 {strides = array<i32>} : memref<16x128xf32, #tpu.memory_space<vmem>>, vector<16x128xf32>,
    } else {
    }
    %c0_i32_6 = arith.constant 0 : i32
    %9 = arith.cmpi eq, %arg2, %c0_i32_6 : i32
    %10 = arith.extui %9 : i1 to i32
    %c0_i32_7 = arith.constant 0 : i32
    %11 = arith.cmpi ne, %10, %c0_i32_7 : i32
    scf.if %11 {
      %c0_8 = arith.constant 0 : index
      %c0_9 = arith.constant 0 : index
      %12 = vector.load %arg7[%c0_8, %c0_9] : memref<16x128xf32, #tpu.memory_space<vmem>>, vector<16x128xf32>
      %c0_10 = arith.constant 0 : index
      %c0_11 = arith.constant 0 : index
      %13 = vector.load %arg5[%c0_10, %c0_11] : memref<1x128xf32, #tpu.memory_space<vmem>>, vector<1x128xf32>
      %14 = vector.broadcast %13 : vector<1x128xf32> to vector<16x128xf32>
      %15 = arith.addf %12, %14 : vector<16x128xf32>
      %c0_12 = arith.constant 0 : index
      %c0_13 = arith.constant 0 : index
      %16 = vector.load %arg6[%c0_12, %c0_13] : memref<16x128xf32, #tpu.memory_space<vmem>>, vector<16x128xf32>
      tpu.vector_store %arg6[%c0_12, %c0_13], %15 {strides = array<i32>} : memref<16x128xf32, #tpu.memory_space<vmem>>, vector<16x128xf32>,
    } else {
    }
    return
  }
  func.func @transform_0(%arg0: i32, %arg1: i32, %arg2: i32) -> (i32, i32) {
    %c0_i32 = arith.constant 0 : i32
    return %arg0, %arg2 : i32, i32
  }
  func.func @transform_1(%arg0: i32, %arg1: i32, %arg2: i32) -> (i32, i32) {
    %c0_i32 = arith.constant 0 : i32
    return %arg2, %arg1 : i32, i32
  }
  func.func @transform_2(%arg0: i32, %arg1: i32, %arg2: i32) -> (i32, i32) {
    %c0_i32 = arith.constant 0 : i32
    %c0_i32_0 = arith.constant 0 : i32
    return %c0_i32, %arg1 : i32, i32
  }
  func.func @transform_3(%arg0: i32, %arg1: i32, %arg2: i32) -> (i32, i32) {
    %c0_i32 = arith.constant 0 : i32
    return %arg0, %arg1 : i32, i32
  }
}

</mosaic_0001>

<llo_original>
// kernel: _abc_layer_forward_impl.1
$region0: #{_abc_layer_forward_impl.1}
  #allocation0 [shape = 'u32[]', space=smem, size = 0x4, offset = 0x4, fixed_abs, tag = 'smem constant byte address 0x4 - core index']
  #allocation1 [shape = 'u32[72,128]{1,0:T(1,128)}', space=vmem, size = 0x9000, scoped, tag = 'internal scratch']
  #allocation2 [shape = 'f32[16,128]{1,0:T(8,128)}', space=vmem, size = 0x2000, scoped, tag = 'scratch operand']
  %s0 = inlined_call_operand.vmem [shape: bf16[16,128], index: 0, kind: input, shape index: {}]
  %s1 = inlined_call_operand.vmem [shape: bf16[128,128], index: 1, kind: input, shape index: {}]
  %s2 = inlined_call_operand.vmem [shape: f32[1,128], index: 2, kind: input, shape index: {}]
  %s3 = inlined_call_operand.hbm [shape: f32[16,128], index: 3, kind: output, shape index: {}]
  %s4 = sld [smem:[#allocation0]]
  $region34: #{_abc_layer_forward_impl.1} parent=0
    _
  %s6 = ssub.s32 1, %s4
  %s7 = scalar_select 0, %s6, %s4
  $region1: #{_abc_layer_forward_impl.1} parent=0
    #allocation3 [shape = 'u8[8192]{0}', space=vmem, size = 0x2000, scoped, tag = 'output window, operand 0, single buffered']
    #allocation4 [shape = 's32[1]{0}', space=sflag, size = 0x4, scoped, tag = 'scoped memory for _abc_layer_forward_impl.1']
    %8 = vsyncpa [#allocation4], 0
    // Predicated region
    $region2: #{_abc_layer_forward_impl.1} parent=1 // pred_check
      _
    $region3: #{_abc_layer_forward_impl.1} parent=1 // pred_check_branch
      %10 = sbr.rel (0) target = $region5
    $region4: #{_abc_layer_forward_impl.1} parent=1 // pred_region
      _
    $region5: #{_abc_layer_forward_impl.1} parent=1 // pred_fallthru
      _
    // Predicated region
    $region6: #{_abc_layer_forward_impl.1} parent=1 // pred_check
      _
    $region7: #{_abc_layer_forward_impl.1} parent=1 // pred_check_branch
      %12 = sbr.rel (0) target = $region9
    $region8: #{_abc_layer_forward_impl.1} parent=1 // pred_region
      _
    $region9: #{_abc_layer_forward_impl.1} parent=1 // pred_fallthru
      _
    // Predicated region
    $region10: #{_abc_layer_forward_impl.1} parent=1 // pred_check
      _
    $region11: #{_abc_layer_forward_impl.1} parent=1 // pred_check_branch
      %14 = sbr.rel (0) target = $region13
    $region12: #{_abc_layer_forward_impl.1} parent=1 // pred_region
      _
    $region13: #{_abc_layer_forward_impl.1} parent=1 // pred_fallthru
      _
    %v15 = vld [vmem:[%s0] sm:$0xf]
    %v16 = vld [vmem:[%s0 + $0x4] sm:$0xf]
    %v17 = vld [vmem:[%s1] sm:$0xf]
    %v18 = vld [vmem:[%s1 + $0x4] sm:$0xf]
    %v19 = vld [vmem:[%s1 + $0x8] sm:$0xf]
    %v20 = vld [vmem:[%s1 + $0xc] sm:$0xf]
    %v21 = vld [vmem:[%s1 + $0x10] sm:$0xf]
    %v22 = vld [vmem:[%s1 + $0x14] sm:$0xf]
    %v23 = vld [vmem:[%s1 + $0x18] sm:$0xf]
    %v24 = vld [vmem:[%s1 + $0x1c] sm:$0xf]
    %v25 = vld [vmem:[%s1 + $0x20] sm:$0xf]
    %v26 = vld [vmem:[%s1 + $0x24] sm:$0xf]
    %v27 = vld [vmem:[%s1 + $0x28] sm:$0xf]
    %v28 = vld [vmem:[%s1 + $0x2c] sm:$0xf]
    %v29 = vld [vmem:[%s1 + $0x30] sm:$0xf]
    %v30 = vld [vmem:[%s1 + $0x34] sm:$0xf]
    %v31 = vld [vmem:[%s1 + $0x38] sm:$0xf]
    %v32 = vld [vmem:[%s1 + $0x3c] sm:$0xf]
    %v35 = vunpack.c.l.b16 %v15
    %v36 = vunpack.c.l.b16 %v16
    %v37 = vpack.c.b16 %v36, %v35
    %v55 = vunpack.c.l.b16 %v17
    %v56 = vunpack.c.l.b16 %v18
    %v57 = vunpack.c.l.b16 %v19
    %v58 = vunpack.c.l.b16 %v20
    %v59 = vunpack.c.l.b16 %v21
    %v60 = vunpack.c.l.b16 %v22
    %v61 = vunpack.c.l.b16 %v23
    %v62 = vunpack.c.l.b16 %v24
    %v63 = vunpack.c.l.b16 %v25
    %v64 = vunpack.c.l.b16 %v26
    %v65 = vunpack.c.l.b16 %v27
    %v66 = vunpack.c.l.b16 %v28
    %v67 = vunpack.c.l.b16 %v29
    %v68 = vunpack.c.l.b16 %v30
    %v69 = vunpack.c.l.b16 %v31
    %v70 = vunpack.c.l.b16 %v32
    %v71 = vpack.c.b16 %v56, %v55
    %v72 = vpack.c.b16 %v58, %v57
    %v73 = vpack.c.b16 %v60, %v59
    %v74 = vpack.c.b16 %v62, %v61
    %v75 = vpack.c.b16 %v64, %v63
    %v76 = vpack.c.b16 %v66, %v65
    %v77 = vpack.c.b16 %v68, %v67
    %v78 = vpack.c.b16 %v70, %v69
    %87 = vmatpush.bf16.msra.mxu0 %v78
    %88 = vmatpush.bf16.msra.mxu0 %v77
    %89 = vmatpush.bf16.msra.mxu0 %v76
    %90 = vmatpush.bf16.msra.mxu0 %v75
    %91 = vmatpush.bf16.msra.mxu0 %v74
    %92 = vmatpush.bf16.msra.mxu0 %v73
    %93 = vmatpush.bf16.msra.mxu0 %v72
    %94 = vmatpush.bf16.msra.mxu0 %v71
    %95 = vmatmul.bf16.gmra.mxu0 %v37
    %v96 = vpop.f32.mrf.mxu0
    %v97 = vadd.f32 0.0, %v96
    %v98 = vpop.f32.mrf.mxu0
    %v99 = vadd.f32 0.0, %v98
    %100 = vdwg.mxu0
    %p101 = scmp.eq.s32.totalorder 0, 0
    // Predicated region
    $region14: #{_abc_layer_forward_impl.1} parent=1 // pred_check
      %p102 = pneg %p101
    $region15: #{_abc_layer_forward_impl.1} parent=1 // pred_check_branch
      %104 = sbr.rel (%p102) target = $region17
    $region16: #{_abc_layer_forward_impl.1} parent=1 // pred_region
      %105 = vst [vmem:[#allocation2] sm:$0xff] %v97
      %106 = vst [vmem:[#allocation2 + $0x8] sm:$0xff] %v99
    $region17: #{_abc_layer_forward_impl.1} parent=1 // pred_fallthru
      _
    %p107 = scmp.ne.s32.totalorder 0, 0
    // Predicated region
    $region18: #{_abc_layer_forward_impl.1} parent=1 // pred_check
      %p108 = pneg %p107
    $region19: #{_abc_layer_forward_impl.1} parent=1 // pred_check_branch
      %110 = sbr.rel (%p108) target = $region21
    $region20: #{_abc_layer_forward_impl.1} parent=1 // pred_region
      %v111 = vld [vmem:[#allocation2] sm:$0xff]
      %v112 = vld [vmem:[#allocation2 + $0x8] sm:$0xff]
      %v113 = vadd.f32 %v111, %v97
      %v114 = vadd.f32 %v112, %v99
      %115 = vst [vmem:[#allocation2] sm:$0xff] %v113
      %116 = vst [vmem:[#allocation2 + $0x8] sm:$0xff] %v114
    $region21: #{_abc_layer_forward_impl.1} parent=1 // pred_fallthru
      _
    // Predicated region
    $region22: #{_abc_layer_forward_impl.1} parent=1 // pred_check
      %p117 = pneg %p101
    $region23: #{_abc_layer_forward_impl.1} parent=1 // pred_check_branch
      %119 = sbr.rel (%p117) target = $region25
    $region24: #{_abc_layer_forward_impl.1} parent=1 // pred_region
      %v120 = vld [vmem:[#allocation2] sm:$0xff]
      %v121 = vld [vmem:[#allocation2 + $0x8] sm:$0xff]
      %v122 = vld [vmem:[%s2] sm:$0x1]
      %v124 = vperm.slane %v122, 0
      %v126 = vadd.f32 %v120, %v124
      %v127 = vadd.f32 %v121, %v124
      %128 = vst [vmem:[#allocation3] sm:$0xff] %v126
      %129 = vst [vmem:[#allocation3 + $0x8] sm:$0xff] %v127
    $region25: #{_abc_layer_forward_impl.1} parent=1 // pred_fallthru
      _
    // Predicated region
    $region26: #{_abc_layer_forward_impl.1} parent=1 // pred_check
      _
    $region27: #{_abc_layer_forward_impl.1} parent=1 // pred_check_branch
      %131 = sbr.rel (0) target = $region29
    $region28: #{_abc_layer_forward_impl.1} parent=1 // pred_region
      %133 = vsyncadd [#allocation4], 0
      %s134 = sshll.u32 [#allocation3], 4
      %s135 = int_to_ptr.vmem [resolvable:$true] %s134
      %s136 = sshll.u32 %s3, 4
      %s137 = int_to_ptr.hbm [resolvable:$true] %s136
      %142 = dma.vmem_to_hbm [thread:$0]  %s135, 256, %s137, [#allocation4], 128, 128, 8
    $region29: #{_abc_layer_forward_impl.1} parent=1 // pred_fallthru
      _
    // Predicated region
    $region30: #{_abc_layer_forward_impl.1} parent=1 // pred_check
      _
    $region31: #{_abc_layer_forward_impl.1} parent=1 // pred_check_branch
      %144 = sbr.rel (0) target = $region33
    $region32: #{_abc_layer_forward_impl.1} parent=1 // pred_region
      %146 = dma.done [#allocation4], 256
    $region33: #{_abc_layer_forward_impl.1} parent=1 // pred_fallthru
      _
    %147 = vsyncpa [#allocation4], 1

</llo_original>
